<compile_context>
chip_gen: v6e
topology: v6e:2x2x1
jax: 0.10.0
libtpu: 0.0.40
codegen_flags: <defaults>
</compile_context>

<pallas_src>
import jax
import jax.numpy as jnp
from jax.experimental import pallas as pl
from jax.experimental.pallas import tpu as pltpu

_EPS = 1e-5


# ----------------------------------------------------------------------------
# Kernels
# ----------------------------------------------------------------------------
def _bn_epilogue(y, g, beta):
    """Batch-stat BatchNorm with folded affine. y is (B, tn) float32."""
    inv_b = 1.0 / y.shape[0]
    mean = jnp.sum(y, axis=0, keepdims=True) * inv_b                   # (1, tn)
    var = jnp.sum(y * y, axis=0, keepdims=True) * inv_b - mean * mean  # biased
    var = jnp.maximum(var, 0.0)                                        # fp guard
    s = g * jax.lax.rsqrt(var + _EPS)                                  # (1, tn)
    t = beta - mean * s                                                # (1, tn)
    return y * s + t


def _mlp_bn_kernel(x_ref, w1_ref, b1_ref, w2_ref, g_ref, beta_ref, o_ref, h_ref):
    """Fused  BN( ReLU(x @ W1 + b1) @ W2 )  over one output-feature tile.

    h = ReLU(x @ W1 + b1) is computed once (grid step 0) into a persistent
    bf16 VMEM scratch; every feature tile then does one (B,H) x (H,tn) matmul.
    The W2 bias is intentionally not applied: it cancels exactly under
    batch-statistics BatchNorm.
    """
    @pl.when(pl.program_id(0) == 0)
    def _():
        h = jnp.dot(x_ref[...].astype(jnp.bfloat16), w1_ref[...],
                    preferred_element_type=jnp.float32)
        h_ref[...] = jnp.maximum(h + b1_ref[...], 0.0).astype(h_ref.dtype)

    y = jnp.dot(h_ref[...], w2_ref[...], preferred_element_type=jnp.float32)
    o_ref[...] = _bn_epilogue(y, g_ref[...], beta_ref[...]).astype(o_ref.dtype)


def _linear_bn_kernel(x_ref, w_ref, g_ref, beta_ref, o_ref):
    """One output-feature tile of  BN(x @ W)  (Linear bias cancels under BN)."""
    y = jnp.dot(x_ref[...].astype(jnp.bfloat16), w_ref[...],
                preferred_element_type=jnp.float32)
    o_ref[...] = _bn_epilogue(y, g_ref[...], beta_ref[...]).astype(o_ref.dtype)


# ----------------------------------------------------------------------------
# Tiling / compiler-param helpers
# ----------------------------------------------------------------------------
def _pad_to_128(n):
    return ((n + 127) // 128) * 128


def _pick_tile(dim, max_tile=512):
    """Largest multiple of 128 dividing `dim` (<= max_tile). `dim` is 128-aligned."""
    assert dim % 128 == 0
    best = 128
    t = 128
    while t <= min(max_tile, dim):
        if dim % t == 0:
            best = t
        t += 128
    return best


def _compiler_params(est_vmem_bytes, semantics):
    # Budget = actual tile footprint * 1.5 margin, floor 32 MiB (above the
    # v5e 16 MiB default), cap 64 MiB (v7x physical).  Double-buffering of
    # the streamed specs is already included in est_vmem_bytes.
    budget = int(min(max(est_vmem_bytes * 3 // 2, 32 * 1024 * 1024),
                     64 * 1024 * 1024))
    return pltpu.CompilerParams(
        dimension_semantics=semantics,
        vmem_limit_bytes=budget,
    )


# ----------------------------------------------------------------------------
# pallas_call wrappers
# ----------------------------------------------------------------------------
@jax.jit
def _run_mlp_bn(x, w1, b1, w2, gamma, beta):
    B, Din = x.shape
    Hp = w1.shape[1]
    Dp = w2.shape[1]
    tn = _pick_tile(Dp)
    # resident: x (f32), W1 (bf16), b1 (f32), h scratch (bf16)
    # streamed (x2 double-buffer): W2 tile (bf16), gamma+beta (f32), out (f32)
    est = (B * Din * 4 + Din * Hp * 2 + Hp * 4 + B * Hp * 2
           + 2 * (Hp * tn * 2 + 2 * tn * 4 + B * tn * 4))
    return pl.pallas_call(
        _mlp_bn_kernel,
        out_shape=jax.ShapeDtypeStruct((B, Dp), jnp.float32),
        grid=(Dp // tn,),
        in_specs=[
            pl.BlockSpec((B, Din), lambda j: (0, 0)),    # x: f32, VMEM-resident
            pl.BlockSpec((Din, Hp), lambda j: (0, 0)),   # W1: bf16, resident
            pl.BlockSpec((1, Hp), lambda j: (0, 0)),     # b1: resident
            pl.BlockSpec((Hp, tn), lambda j: (0, j)),    # W2 column tile (streamed)
            pl.BlockSpec((1, tn), lambda j: (0, j)),     # gamma tile
            pl.BlockSpec((1, tn), lambda j: (0, j)),     # beta tile
        ],
        out_specs=pl.BlockSpec((B, tn), lambda j: (0, j)),
        scratch_shapes=[pltpu.VMEM((B, Hp), jnp.bfloat16)],  # persistent h
        # "arbitrary": later feature tiles read the h scratch written at step 0.
        compiler_params=_compiler_params(est, ("arbitrary",)),
    )(x, w1, b1, w2, gamma, beta)


@jax.jit
def _run_linear_bn(x, w, gamma, beta):
    B, Din = x.shape
    Dp = w.shape[1]
    tn = _pick_tile(Dp)
    est = (B * Din * 4
           + 2 * (Din * tn * 2 + 2 * tn * 4 + B * tn * 4))
    return pl.pallas_call(
        _linear_bn_kernel,
        out_shape=jax.ShapeDtypeStruct((B, Dp), jnp.float32),
        grid=(Dp // tn,),
        in_specs=[
            pl.BlockSpec((B, Din), lambda j: (0, 0)),    # x: f32, resident
            pl.BlockSpec((Din, tn), lambda j: (0, j)),   # W column tile (streamed)
            pl.BlockSpec((1, tn), lambda j: (0, j)),     # gamma tile
            pl.BlockSpec((1, tn), lambda j: (0, j)),     # beta tile
        ],
        out_specs=pl.BlockSpec((B, tn), lambda j: (0, j)),
        compiler_params=_compiler_params(est, ("parallel",)),
    )(x, w, gamma, beta)


# ----------------------------------------------------------------------------
# Parameter construction (mimics torch.nn.Linear default init; weights bf16,
# feature axes zero-padded to multiples of 128 for lane-dense tiles).
# ----------------------------------------------------------------------------
def _linear_params(key, fan_in, fan_out, fan_out_padded):
    kw, kb = jax.random.split(key)
    bound = 1.0 / (fan_in ** 0.5)
    w = jax.random.uniform(kw, (fan_in, fan_out), jnp.float32, -bound, bound)
    b = jax.random.uniform(kb, (1, fan_out), jnp.float32, -bound, bound)
    pad = fan_out_padded - fan_out
    if pad:
        w = jnp.pad(w, ((0, 0), (0, pad)))
        b = jnp.pad(b, ((0, 0), (0, pad)))
    # stored pre-transposed (in, out); weight in bf16 for the MXU
    return w.astype(jnp.bfloat16), b


def make_adapter_params(key, input_dim, hidden_dim=512, output_dim=2048):
    hidden_dim = None if not hidden_dim else hidden_dim
    output_dim = input_dim if not output_dim else output_dim
    params = {"input_dim": input_dim, "hidden_dim": hidden_dim,
              "output_dim": output_dim}
    if hidden_dim is None and output_dim == input_dim:
        params["mode"] = "identity"
        return params

    dp = _pad_to_128(output_dim)
    gamma = jnp.ones((1, dp), jnp.float32)
    beta = jnp.zeros((1, dp), jnp.float32)

    if hidden_dim is None:
        k1, _ = jax.random.split(key)
        w, b = _linear_params(k1, input_dim, output_dim, dp)
        params.update(mode="linear_bn", w=w, b=b, gamma=gamma, beta=beta)
        return params

    hp = _pad_to_128(hidden_dim)
    k1, k2 = jax.random.split(key)
    w1, b1 = _linear_params(k1, input_dim, hidden_dim, hp)
    w2, b2 = _linear_params(k2, hidden_dim, output_dim, dp)
    if hp != hidden_dim:  # pad W2's contracted (hidden) axis with zero rows
        w2 = jnp.pad(w2, ((0, hp - hidden_dim), (0, 0)))
    params.update(mode="mlp_bn", w1=w1, b1=b1, w2=w2, b2=b2,
                  gamma=gamma, beta=beta)
    return params


# ----------------------------------------------------------------------------
# Forward
# ----------------------------------------------------------------------------
def adapter_forward(params, x):
    mode = params["mode"]
    if mode == "identity":
        return x
    if mode == "linear_bn":
        # Linear bias not passed: it cancels exactly under batch-stat BN.
        out = _run_linear_bn(x, params["w"], params["gamma"], params["beta"])
    else:
        out = _run_mlp_bn(x, params["w1"], params["b1"], params["w2"],
                          params["gamma"], params["beta"])
    d = params["output_dim"]
    return out if out.shape[1] == d else out[:, :d]


# Pure-JAX reference using the same bf16-operand / f32-accumulate precision
# recipe, *including* the Linear bias before BN (to demonstrate that the
# kernel's bias-drop is output-equivalent) and two-pass variance.
def adapter_forward_ref(params, x):
    mode = params["mode"]
    if mode == "identity":
        return x
    xb = x.astype(jnp.bfloat16)
    if mode == "linear_bn":
        y = jnp.dot(xb, params["w"], preferred_element_type=jnp.float32) + params["b"]
    else:
        h = jnp.maximum(
            jnp.dot(xb, params["w1"], preferred_element_type=jnp.float32)
            + params["b1"], 0.0)
        y = jnp.dot(h.astype(jnp.bfloat16), params["w2"],
                    preferred_element_type=jnp.float32) + params["b2"]
    mean = jnp.mean(y, axis=0, keepdims=True)
    var = jnp.mean((y - mean) ** 2, axis=0, keepdims=True)
    out = (y - mean) / jnp.sqrt(var + _EPS) * params["gamma"] + params["beta"]
    return out[:, :params["output_dim"]]


if __name__ == "__main__":
    key = jax.random.PRNGKey(0)
    k_params, k_x = jax.random.split(key)

    # Small shapes consistent with the module: batch=8, input_dim=32,
    # hidden_dim=64 (exercises 128-padding), output_dim=128 (MLP -> BN mode).
    batch, input_dim, hidden_dim, output_dim = 8, 32, 64, 128
    params = make_adapter_params(k_params, input_dim, hidden_dim, output_dim)
    x = jax.random.normal(k_x, (batch, input_dim), jnp.float32)

    out = jax.block_until_ready(adapter_forward(params, x))
    ref = adapter_forward_ref(params, x)
    assert out.shape == (batch, output_dim)
    assert out.dtype == jnp.float32
    assert jnp.allclose(out, ref, atol=2e-4, rtol=2e-4), \
        float(jnp.max(jnp.abs(out - ref)))

    # Mode 2 (Linear -> BN) coverage.
    params_lin = make_adapter_params(k_params, input_dim,
                                     hidden_dim=None, output_dim=output_dim)
    out_lin = jax.block_until_ready(adapter_forward(params_lin, x))
    ref_lin = adapter_forward_ref(params_lin, x)
    assert jnp.allclose(out_lin, ref_lin, atol=2e-4, rtol=2e-4), \
        float(jnp.max(jnp.abs(out_lin - ref_lin)))

    # Mode 1 (identity) coverage.
    params_id = make_adapter_params(k_params, input_dim,
                                    hidden_dim=None, output_dim=None)
    assert adapter_forward(params_id, x) is x

    print("KERNEL_OK")
</pallas_src>

<mosaic_0001>
module attributes {stable_mosaic.version = 11 : i64} {
  func.func @_mlp_bn_kernel(%arg0: i32, %arg1: memref<8x32xf32, #tpu.memory_space<vmem>>, %arg2: memref<32x128xbf16, #tpu.memory_space<vmem>>, %arg3: memref<1x128xf32, #tpu.memory_space<vmem>>, %arg4: memref<128x128xbf16, #tpu.memory_space<vmem>>, %arg5: memref<1x128xf32, #tpu.memory_space<vmem>>, %arg6: memref<1x128xf32, #tpu.memory_space<vmem>>, %arg7: memref<8x128xf32, #tpu.memory_space<vmem>>, %arg8: memref<8x128xbf16, #tpu.memory_space<vmem>>) attributes {dimension_semantics = [#tpu.dimension_semantics<arbitrary>], iteration_bounds = array<i64: 1>, scalar_prefetch = 0 : i64, scratch_operands = 1 : i64, tpu.core_type = #tpu.core_type<tc>, window_params = [{pipeline_mode = #tpu.pipeline_mode<synchronous>, transform_indices = @transform_0, window_bounds = array<i64: 8, 32>}, {pipeline_mode = #tpu.pipeline_mode<synchronous>, transform_indices = @transform_1, window_bounds = array<i64: 32, 128>}, {pipeline_mode = #tpu.pipeline_mode<synchronous>, transform_indices = @transform_2, window_bounds = array<i64: 1, 128>}, {transform_indices = @transform_3, window_bounds = array<i64: 128, 128>}, {transform_indices = @transform_4, window_bounds = array<i64: 1, 128>}, {transform_indices = @transform_5, window_bounds = array<i64: 1, 128>}, {transform_indices = @transform_6, window_bounds = array<i64: 8, 128>}]} {
    %c0_i32 = arith.constant 0 : i32
    %0 = arith.cmpi eq, %arg0, %c0_i32 : i32
    %1 = arith.extui %0 : i1 to i32
    %c0_i32_0 = arith.constant 0 : i32
    %2 = arith.cmpi ne, %1, %c0_i32_0 : i32
    scf.if %2 {
      %c0_16 = arith.constant 0 : index
      %c0_17 = arith.constant 0 : index
      %32 = vector.load %arg1[%c0_16, %c0_17] : memref<8x32xf32, #tpu.memory_space<vmem>>, vector<8x32xf32>
      %33 = arith.truncf %32 : vector<8x32xf32> to vector<8x32xbf16>
      %c0_18 = arith.constant 0 : index
      %c0_19 = arith.constant 0 : index
      %34 = vector.load %arg2[%c0_18, %c0_19] : memref<32x128xbf16, #tpu.memory_space<vmem>>, vector<32x128xbf16>
      %cst_20 = arith.constant dense<0.000000e+00> : vector<8x128xf32>
      %35 = tpu.matmul %33, %34, %cst_20 {dimension_numbers = #tpu.dot_dimension_numbers<[1], [0], [0], [1], [0, 0, 1, 1], [], []>} : vector<8x32xbf16>, vector<32x128xbf16>, vector<8x128xf32> -> vector<8x128xf32>
      %c0_21 = arith.constant 0 : index
      %c0_22 = arith.constant 0 : index
      %36 = vector.load %arg3[%c0_21, %c0_22] : memref<1x128xf32, #tpu.memory_space<vmem>>, vector<1x128xf32>
      %37 = vector.broadcast %36 : vector<1x128xf32> to vector<8x128xf32>
      %38 = arith.addf %35, %37 : vector<8x128xf32>
      %cst_23 = arith.constant 0.000000e+00 : f32
      %39 = vector.broadcast %cst_23 : f32 to vector<8x128xf32>
      %40 = arith.maximumf %38, %39 : vector<8x128xf32>
      %41 = arith.truncf %40 : vector<8x128xf32> to vector<8x128xbf16>
      %c0_24 = arith.constant 0 : index
      %c0_25 = arith.constant 0 : index
      %42 = vector.load %arg8[%c0_24, %c0_25] : memref<8x128xbf16, #tpu.memory_space<vmem>>, vector<8x128xbf16>
      tpu.vector_store %arg8[%c0_24, %c0_25], %41 {strides = array<i32>} : memref<8x128xbf16, #tpu.memory_space<vmem>>, vector<8x128xbf16>,
    } else {
    }
    %c0 = arith.constant 0 : index
    %c0_1 = arith.constant 0 : index
    %3 = vector.load %arg8[%c0, %c0_1] : memref<8x128xbf16, #tpu.memory_space<vmem>>, vector<8x128xbf16>
    %c0_2 = arith.constant 0 : index
    %c0_3 = arith.constant 0 : index
    %4 = vector.load %arg4[%c0_2, %c0_3] : memref<128x128xbf16, #tpu.memory_space<vmem>>, vector<128x128xbf16>
    %cst = arith.constant dense<0.000000e+00> : vector<8x128xf32>
    %5 = tpu.matmul %3, %4, %cst {dimension_numbers = #tpu.dot_dimension_numbers<[1], [0], [0], [1], [0, 0, 1, 1], [], []>} : vector<8x128xbf16>, vector<128x128xbf16>, vector<8x128xf32> -> vector<8x128xf32>
    %c0_4 = arith.constant 0 : index
    %c0_5 = arith.constant 0 : index
    %6 = vector.load %arg5[%c0_4, %c0_5] : memref<1x128xf32, #tpu.memory_space<vmem>>, vector<1x128xf32>
    %c0_6 = arith.constant 0 : index
    %c0_7 = arith.constant 0 : index
    %7 = vector.load %arg6[%c0_6, %c0_7] : memref<1x128xf32, #tpu.memory_space<vmem>>, vector<1x128xf32>
    %cst_8 = arith.constant dense<0.000000e+00> : vector<128xf32>
    %8 = vector.multi_reduction <add>, %5, %cst_8 [0] : vector<8x128xf32> to vector<128xf32>
    %9 = vector.shape_cast %8 : vector<128xf32> to vector<1x128xf32>
    %cst_9 = arith.constant 1.250000e-01 : f32
    %10 = vector.broadcast %cst_9 : f32 to vector<1x128xf32>
    %11 = arith.mulf %9, %10 : vector<1x128xf32>
    %12 = arith.mulf %5, %5 : vector<8x128xf32>
    %cst_10 = arith.constant dense<0.000000e+00> : vector<128xf32>
    %13 = vector.multi_reduction <add>, %12, %cst_10 [0] : vector<8x128xf32> to vector<128xf32>
    %14 = vector.shape_cast %13 : vector<128xf32> to vector<1x128xf32>
    %cst_11 = arith.constant 1.250000e-01 : f32
    %15 = vector.broadcast %cst_11 : f32 to vector<1x128xf32>
    %16 = arith.mulf %14, %15 : vector<1x128xf32>
    %17 = arith.mulf %11, %11 : vector<1x128xf32>
    %18 = arith.subf %16, %17 : vector<1x128xf32>
    %cst_12 = arith.constant 0.000000e+00 : f32
    %19 = vector.broadcast %cst_12 : f32 to vector<1x128xf32>
    %20 = arith.maximumf %18, %19 : vector<1x128xf32>
    %cst_13 = arith.constant 9.99999974E-6 : f32
    %21 = vector.broadcast %cst_13 : f32 to vector<1x128xf32>
    %22 = arith.addf %20, %21 : vector<1x128xf32>
    %23 = math.rsqrt %22 : vector<1x128xf32>
    %24 = arith.mulf %6, %23 : vector<1x128xf32>
    %25 = arith.mulf %11, %24 : vector<1x128xf32>
    %26 = arith.subf %7, %25 : vector<1x128xf32>
    %27 = vector.broadcast %24 : vector<1x128xf32> to vector<8x128xf32>
    %28 = arith.mulf %5, %27 : vector<8x128xf32>
    %29 = vector.broadcast %26 : vector<1x128xf32> to vector<8x128xf32>
    %30 = arith.addf %28, %29 : vector<8x128xf32>
    %c0_14 = arith.constant 0 : index
    %c0_15 = arith.constant 0 : index
    %31 = vector.load %arg7[%c0_14, %c0_15] : memref<8x128xf32, #tpu.memory_space<vmem>>, vector<8x128xf32>
    tpu.vector_store %arg7[%c0_14, %c0_15], %30 {strides = array<i32>} : memref<8x128xf32, #tpu.memory_space<vmem>>, vector<8x128xf32>,
    return
  }
  func.func @transform_0(%arg0: i32) -> (i32, i32) {
    %c0_i32 = arith.constant 0 : i32
    %c0_i32_0 = arith.constant 0 : i32
    %c0_i32_1 = arith.constant 0 : i32
    return %c0_i32, %c0_i32_0 : i32, i32
  }
  func.func @transform_1(%arg0: i32) -> (i32, i32) {
    %c0_i32 = arith.constant 0 : i32
    %c0_i32_0 = arith.constant 0 : i32
    %c0_i32_1 = arith.constant 0 : i32
    return %c0_i32, %c0_i32_0 : i32, i32
  }
  func.func @transform_2(%arg0: i32) -> (i32, i32) {
    %c0_i32 = arith.constant 0 : i32
    %c0_i32_0 = arith.constant 0 : i32
    %c0_i32_1 = arith.constant 0 : i32
    return %c0_i32, %c0_i32_0 : i32, i32
  }
  func.func @transform_3(%arg0: i32) -> (i32, i32) {
    %c0_i32 = arith.constant 0 : i32
    %c0_i32_0 = arith.constant 0 : i32
    return %c0_i32, %arg0 : i32, i32
  }
  func.func @transform_4(%arg0: i32) -> (i32, i32) {
    %c0_i32 = arith.constant 0 : i32
    %c0_i32_0 = arith.constant 0 : i32
    return %c0_i32, %arg0 : i32, i32
  }
  func.func @transform_5(%arg0: i32) -> (i32, i32) {
    %c0_i32 = arith.constant 0 : i32
    %c0_i32_0 = arith.constant 0 : i32
    return %c0_i32, %arg0 : i32, i32
  }
  func.func @transform_6(%arg0: i32) -> (i32, i32) {
    %c0_i32 = arith.constant 0 : i32
    %c0_i32_0 = arith.constant 0 : i32
    return %c0_i32, %arg0 : i32, i32
  }
}

</mosaic_0001>

<llo_original>
// kernel: _run_mlp_bn.1
$region0: #{_run_mlp_bn.1}
  #allocation0 [shape = 'u32[]', space=smem, size = 0x4, offset = 0x4, fixed_abs, tag = 'smem constant byte address 0x4 - core index']
  #allocation1 [shape = 'u32[144,128]{1,0:T(1,128)}', space=vmem, size = 0x12000, scoped, tag = 'internal scratch']
  #allocation2 [shape = 'bf16[8,128]{1,0:T(8,128)(2,1)}', space=vmem, size = 0x800, scoped, tag = 'scratch operand']
  %s0 = inlined_call_operand.hbm [shape: f32[8,32], index: 0, kind: input, shape index: {}]
  %s1 = inlined_call_operand.hbm [shape: bf16[32,128], index: 1, kind: input, shape index: {}]
  %s2 = inlined_call_operand.vmem [shape: f32[1,128], index: 2, kind: input, shape index: {}]
  %s3 = inlined_call_operand.hbm [shape: bf16[128,128], index: 3, kind: input, shape index: {}]
  %s4 = inlined_call_operand.vmem [shape: f32[1,128], index: 4, kind: input, shape index: {}]
  %s5 = inlined_call_operand.vmem [shape: f32[1,128], index: 5, kind: input, shape index: {}]
  %s6 = inlined_call_operand.hbm [shape: f32[8,128], index: 6, kind: output, shape index: {}]
  %s7 = sld [smem:[#allocation0]]
  $region50: #{_run_mlp_bn.1} parent=0
    _
  %s9 = ssub.s32 1, %s7
  %s10 = scalar_select 0, %s9, %s7
  $region1: #{_run_mlp_bn.1} parent=0
    #allocation3 [shape = 'u8[4096]{0}', space=vmem, size = 0x1000, scoped, tag = 'input window, operand 0, single buffered']
    #allocation4 [shape = 's32[1]{0}', space=sflag, size = 0x4, scoped, tag = 'scoped memory for _run_mlp_bn.1']
    #allocation5 [shape = 's32[1]{0}', space=sflag, size = 0x4, scoped, tag = 'scoped memory for _run_mlp_bn.1']
    #allocation6 [shape = 'u8[8192]{0}', space=vmem, size = 0x2000, scoped, tag = 'input window, operand 1, single buffered']
    #allocation7 [shape = 's32[1]{0}', space=sflag, size = 0x4, scoped, tag = 'scoped memory for _run_mlp_bn.1']
    #allocation8 [shape = 'u8[32768]{0}', space=vmem, size = 0x8000, scoped, tag = 'input window, operand 3, single buffered']
    #allocation9 [shape = 'u8[4096]{0}', space=vmem, size = 0x1000, scoped, tag = 'output window, operand 0, single buffered']
    %11 = vsyncpa [#allocation4], 0
    %12 = vsyncpa [#allocation7], 0
    %13 = vsyncpa [#allocation5], 0
    // Predicated region
    $region2: #{_run_mlp_bn.1} parent=1 // pred_check
      _
    $region3: #{_run_mlp_bn.1} parent=1 // pred_check_branch
      %15 = sbr.rel (0) target = $region5
    $region4: #{_run_mlp_bn.1} parent=1 // pred_region
      %s17 = ssub.s32 128, 128
      %18 = vsyncadd [#allocation4], %s17
      %s20 = sshll.u32 [#allocation3], 4
      %s21 = int_to_ptr.vmem [resolvable:$true] %s20
      %23 = dma.hbm_to_vmem [thread:$0]  %s0, 128, %s21, [#allocation4]
    $region5: #{_run_mlp_bn.1} parent=1 // pred_fallthru
      _
    // Predicated region
    $region6: #{_run_mlp_bn.1} parent=1 // pred_check
      _
    $region7: #{_run_mlp_bn.1} parent=1 // pred_check_branch
      %25 = sbr.rel (0) target = $region9
    $region8: #{_run_mlp_bn.1} parent=1 // pred_region
      %s27 = ssub.s32 256, 256
      %28 = vsyncadd [#allocation7], %s27
      %s29 = sshll.u32 [#allocation6], 4
      %s30 = int_to_ptr.vmem [resolvable:$true] %s29
      %35 = dma.hbm_to_vmem [thread:$0]  %s1, 256, %s30, [#allocation7], 64, 64, 4
    $region9: #{_run_mlp_bn.1} parent=1 // pred_fallthru
      _
    // Predicated region
    $region10: #{_run_mlp_bn.1} parent=1 // pred_check
      _
    $region11: #{_run_mlp_bn.1} parent=1 // pred_check_branch
      %37 = sbr.rel (0) target = $region13
    $region12: #{_run_mlp_bn.1} parent=1 // pred_region
      _
    $region13: #{_run_mlp_bn.1} parent=1 // pred_fallthru
      _
    // Predicated region
    $region14: #{_run_mlp_bn.1} parent=1 // pred_check
      _
    $region15: #{_run_mlp_bn.1} parent=1 // pred_check_branch
      %39 = sbr.rel (0) target = $region17
    $region16: #{_run_mlp_bn.1} parent=1 // pred_region
      %s41 = ssub.s32 1024, 1024
      %42 = vsyncadd [#allocation7], %s41
      %s43 = sshll.u32 [#allocation8], 4
      %s44 = int_to_ptr.vmem [resolvable:$true] %s43
      %49 = dma.hbm_to_vmem [thread:$0]  %s3, 1024, %s44, [#allocation7], 64, 64, 4
    $region17: #{_run_mlp_bn.1} parent=1 // pred_fallthru
      _
    // Predicated region
    $region18: #{_run_mlp_bn.1} parent=1 // pred_check
      _
    $region19: #{_run_mlp_bn.1} parent=1 // pred_check_branch
      %51 = sbr.rel (0) target = $region21
    $region20: #{_run_mlp_bn.1} parent=1 // pred_region
      _
    $region21: #{_run_mlp_bn.1} parent=1 // pred_fallthru
      _
    // Predicated region
    $region22: #{_run_mlp_bn.1} parent=1 // pred_check
      _
    $region23: #{_run_mlp_bn.1} parent=1 // pred_check_branch
      %53 = sbr.rel (0) target = $region25
    $region24: #{_run_mlp_bn.1} parent=1 // pred_region
      _
    $region25: #{_run_mlp_bn.1} parent=1 // pred_fallthru
      _
    // Predicated region
    $region26: #{_run_mlp_bn.1} parent=1 // pred_check
      _
    $region27: #{_run_mlp_bn.1} parent=1 // pred_check_branch
      %55 = sbr.rel (0) target = $region29
    $region28: #{_run_mlp_bn.1} parent=1 // pred_region
      %56 = dma.done [#allocation4], 128
    $region29: #{_run_mlp_bn.1} parent=1 // pred_fallthru
      _
    // Predicated region
    $region30: #{_run_mlp_bn.1} parent=1 // pred_check
      _
    $region31: #{_run_mlp_bn.1} parent=1 // pred_check_branch
      %58 = sbr.rel (0) target = $region33
    $region32: #{_run_mlp_bn.1} parent=1 // pred_region
      %59 = dma.done [#allocation7], 256
    $region33: #{_run_mlp_bn.1} parent=1 // pred_fallthru
      _
    // Predicated region
    $region34: #{_run_mlp_bn.1} parent=1 // pred_check
      _
    $region35: #{_run_mlp_bn.1} parent=1 // pred_check_branch
      %61 = sbr.rel (0) target = $region37
    $region36: #{_run_mlp_bn.1} parent=1 // pred_region
      %62 = dma.done [#allocation7], 1024
    $region37: #{_run_mlp_bn.1} parent=1 // pred_fallthru
      _
    %p64 = scmp.eq.s32.totalorder 0, 0
    // Predicated region
    $region38: #{_run_mlp_bn.1} parent=1 // pred_check
      %p65 = pneg %p64
    $region39: #{_run_mlp_bn.1} parent=1 // pred_check_branch
      %67 = sbr.rel (%p65) target = $region41
    $region40: #{_run_mlp_bn.1} parent=1 // pred_region
      %v68 = vld [vmem:[#allocation3] sm:$0xff]
      %v69 = vpack.c.bf16 %v68, %v68
      %v70 = vld [vmem:[#allocation6] sm:$0xf]
      %v71 = vld [vmem:[#allocation6 + $0x4] sm:$0xf]
      %v72 = vld [vmem:[#allocation6 + $0x8] sm:$0xf]
      %v73 = vld [vmem:[#allocation6 + $0xc] sm:$0xf]
      %v74 = vld [vmem:[%s2] sm:$0x1]
      %v76 = vlaneseq
      %v77 = vshrl.u32 %v76, 7
      %v78 = vsub.s32 0, %v77
      %v79 = vrot.slane %v74, %v78
      %v85 = vunpack.c.l.b16 %v70
      %v86 = vunpack.c.l.b16 %v71
      %v87 = vunpack.c.l.b16 %v72
      %v88 = vunpack.c.l.b16 %v73
      %v89 = vpack.c.b16 %v86, %v85
      %v90 = vpack.c.b16 %v88, %v87
      %vm93 = vcmask 261120
      %v95 = vsel %vm93, %v69, 0
      %97 = vmatprep.subr.bf16.mxu0 0
      %98 = vmatpush1.bf16.msra.mxu0 0
      %99 = vmatprep.subr.bf16.mxu0 0
      %100 = vmatpush1.bf16.msra.mxu0 0
      %101 = vmatprep.subr.bf16.mxu0 0
      %102 = vmatpush1.bf16.msra.mxu0 0
      %103 = vmatprep.subr.bf16.mxu0 0
      %104 = vmatpush1.bf16.msra.mxu0 0
      %105 = vmatprep.subr.bf16.mxu0 0
      %106 = vmatpush1.bf16.msra.mxu0 0
      %107 = vmatprep.subr.bf16.mxu0 0
      %108 = vmatpush1.bf16.msra.mxu0 0
      %109 = vmatprep.subr.bf16.mxu0 0
      %110 = vmatpush1.bf16.msra.mxu0 %v90
      %111 = vmatprep.subr.bf16.mxu0 0
      %112 = vmatpush1.bf16.msra.mxu0 %v89
      %113 = vmatprep.subr.bf16.mxu0 0
      %114 = vmatpush2.bf16.msra.mxu0 0
      %115 = vmatprep.subr.bf16.mxu0 0
      %116 = vmatpush2.bf16.msra.mxu0 0
      %117 = vmatprep.subr.bf16.mxu0 0
      %118 = vmatpush2.bf16.msra.mxu0 0
      %119 = vmatprep.subr.bf16.mxu0 0
      %120 = vmatpush2.bf16.msra.mxu0 0
      %121 = vmatprep.subr.bf16.mxu0 0
      %122 = vmatpush2.bf16.msra.mxu0 0
      %123 = vmatprep.subr.bf16.mxu0 0
      %124 = vmatpush2.bf16.msra.mxu0 0
      %125 = vmatprep.subr.bf16.mxu0 0
      %126 = vmatpush2.bf16.msra.mxu0 0
      %127 = vmatprep.subr.bf16.mxu0 0
      %128 = vmatpush2.bf16.msra.mxu0 0
      %129 = vmatprep.mubr.bf16.mxu0 0
      %130 = vmatmul.mubr.bf16.gmra.mxu0 %v95
      %v131 = vpop.f32.mrf.mxu0
      %v132 = vadd.f32 %v79, %v131
      %v133 = vpop.f32.mrf.mxu0
      %v134 = vpop.f32.mrf.mxu0
      %v135 = vpop.f32.mrf.mxu0
      %136 = vdwg.mxu0
      %v137 = vmax.f32 %v132, 0.0
      %v138 = vpack.c.bf16 %v137, %v137
      %139 = vst [vmem:[#allocation2] sm:$0xf] %v138
    $region41: #{_run_mlp_bn.1} parent=1 // pred_fallthru
      _
    %v140 = vld [vmem:[#allocation2] sm:$0xf]
    %v141 = vld [vmem:[#allocation8] sm:$0xf]
    %v142 = vld [vmem:[#allocation8 + $0x4] sm:$0xf]
    %v143 = vld [vmem:[#allocation8 + $0x8] sm:$0xf]
    %v144 = vld [vmem:[#allocation8 + $0xc] sm:$0xf]
    %v145 = vld [vmem:[#allocation8 + $0x10] sm:$0xf]
    %v146 = vld [vmem:[#allocation8 + $0x14] sm:$0xf]
    %v147 = vld [vmem:[#allocation8 + $0x18] sm:$0xf]
    %v148 = vld [vmem:[#allocation8 + $0x1c] sm:$0xf]
    %v149 = vld [vmem:[#allocation8 + $0x20] sm:$0xf]
    %v150 = vld [vmem:[#allocation8 + $0x24] sm:$0xf]
    %v151 = vld [vmem:[#allocation8 + $0x28] sm:$0xf]
    %v152 = vld [vmem:[#allocation8 + $0x2c] sm:$0xf]
    %v153 = vld [vmem:[#allocation8 + $0x30] sm:$0xf]
    %v154 = vld [vmem:[#allocation8 + $0x34] sm:$0xf]
    %v155 = vld [vmem:[#allocation8 + $0x38] sm:$0xf]
    %v156 = vld [vmem:[#allocation8 + $0x3c] sm:$0xf]
    %v173 = vunpack.c.l.b16 %v141
    %v174 = vunpack.c.l.b16 %v142
    %v175 = vunpack.c.l.b16 %v143
    %v176 = vunpack.c.l.b16 %v144
    %v177 = vunpack.c.l.b16 %v145
    %v178 = vunpack.c.l.b16 %v146
    %v179 = vunpack.c.l.b16 %v147
    %v180 = vunpack.c.l.b16 %v148
    %v181 = vunpack.c.l.b16 %v149
    %v182 = vunpack.c.l.b16 %v150
    %v183 = vunpack.c.l.b16 %v151
    %v184 = vunpack.c.l.b16 %v152
    %v185 = vunpack.c.l.b16 %v153
    %v186 = vunpack.c.l.b16 %v154
    %v187 = vunpack.c.l.b16 %v155
    %v188 = vunpack.c.l.b16 %v156
    %v189 = vpack.c.b16 %v174, %v173
    %v190 = vpack.c.b16 %v176, %v175
    %v191 = vpack.c.b16 %v178, %v177
    %v192 = vpack.c.b16 %v180, %v179
    %v193 = vpack.c.b16 %v182, %v181
    %v194 = vpack.c.b16 %v184, %v183
    %v195 = vpack.c.b16 %v186, %v185
    %v196 = vpack.c.b16 %v188, %v187
    %205 = vmatprep.subr.bf16.mxu0 0
    %206 = vmatpush1.bf16.msra.mxu0 %v196
    %207 = vmatprep.subr.bf16.mxu0 0
    %208 = vmatpush1.bf16.msra.mxu0 %v195
    %209 = vmatprep.subr.bf16.mxu0 0
    %210 = vmatpush1.bf16.msra.mxu0 %v194
    %211 = vmatprep.subr.bf16.mxu0 0
    %212 = vmatpush1.bf16.msra.mxu0 %v193
    %213 = vmatprep.subr.bf16.mxu0 0
    %214 = vmatpush1.bf16.msra.mxu0 %v192
    %215 = vmatprep.subr.bf16.mxu0 0
    %216 = vmatpush1.bf16.msra.mxu0 %v191
    %217 = vmatprep.subr.bf16.mxu0 0
    %218 = vmatpush1.bf16.msra.mxu0 %v190
    %219 = vmatprep.subr.bf16.mxu0 0
    %220 = vmatpush1.bf16.msra.mxu0 %v189
    %221 = vmatprep.subr.bf16.mxu0 0
    %222 = vmatpush2.bf16.msra.mxu0 0
    %223 = vmatprep.subr.bf16.mxu0 0
    %224 = vmatpush2.bf16.msra.mxu0 0
    %225 = vmatprep.subr.bf16.mxu0 0
    %226 = vmatpush2.bf16.msra.mxu0 0
    %227 = vmatprep.subr.bf16.mxu0 0
    %228 = vmatpush2.bf16.msra.mxu0 0
    %229 = vmatprep.subr.bf16.mxu0 0
    %230 = vmatpush2.bf16.msra.mxu0 0
    %231 = vmatprep.subr.bf16.mxu0 0
    %232 = vmatpush2.bf16.msra.mxu0 0
    %233 = vmatprep.subr.bf16.mxu0 0
    %234 = vmatpush2.bf16.msra.mxu0 0
    %235 = vmatprep.subr.bf16.mxu0 0
    %236 = vmatpush2.bf16.msra.mxu0 0
    %237 = vmatprep.mubr.bf16.mxu0 0
    %238 = vmatmul.mubr.bf16.gmra.mxu0 %v140
    %v239 = vpop.f32.mrf.mxu0
    %v240 = vadd.f32 0.0, %v239
    %v241 = vpop.f32.mrf.mxu0
    %v242 = vpop.f32.mrf.mxu0
    %v243 = vpop.f32.mrf.mxu0
    %244 = vdwg.mxu0
    %v245 = vld [vmem:[%s4] sm:$0x1]
    %v246 = vld [vmem:[%s5] sm:$0x1]
    %v247 = vrot.slane %v240, 4
    %v248 = vadd.f32 %v240, %v247
    %v249 = vrot.slane %v248, 2
    %v250 = vadd.f32 %v248, %v249
    %v251 = vrot.slane %v250, 1
    %v252 = vadd.f32 %v250, %v251
    %v253 = vmul.f32 %v252, 0.125
    %v254 = vmul.f32 %v240, %v240
    %v255 = vrot.slane %v254, 4
    %v256 = vadd.f32 %v254, %v255
    %v257 = vrot.slane %v256, 2
    %v258 = vadd.f32 %v256, %v257
    %v259 = vrot.slane %v258, 1
    %v260 = vadd.f32 %v258, %v259
    %v261 = vmul.f32 %v260, 0.125
    %v262 = vmul.f32 %v253, %v253
    %v263 = vsub.f32 %v261, %v262
    %v264 = vmax.f32 %v263, 0.0
    %v265 = vadd.f32 %v264, 1e-05
    %v266 = vrsqrt.pop %v265
    %v267 = vmul.f32 %v245, %v266
    %v268 = vmul.f32 %v253, %v267
    %v269 = vsub.f32 %v246, %v268
    %v271 = vlaneseq
    %v272 = vshrl.u32 %v271, 7
    %v273 = vsub.s32 0, %v272
    %v274 = vrot.slane %v267, %v273
    %v276 = vmul.f32 %v240, %v274
    %v278 = vlaneseq
    %v279 = vshrl.u32 %v278, 7
    %v280 = vsub.s32 0, %v279
    %v281 = vrot.slane %v269, %v280
    %v283 = vadd.f32 %v276, %v281
    %284 = vst [vmem:[#allocation9] sm:$0xff] %v283
    // Predicated region
    $region42: #{_run_mlp_bn.1} parent=1 // pred_check
      _
    $region43: #{_run_mlp_bn.1} parent=1 // pred_check_branch
      %286 = sbr.rel (0) target = $region45
    $region44: #{_run_mlp_bn.1} parent=1 // pred_region
      %s288 = ssub.s32 128, 128
      %289 = vsyncadd [#allocation5], %s288
      %s291 = sshll.u32 [#allocation9], 4
      %s292 = int_to_ptr.vmem [resolvable:$true] %s291
      %294 = dma.vmem_to_hbm [thread:$0]  %s292, 128, %s6, [#allocation5]
    $region45: #{_run_mlp_bn.1} parent=1 // pred_fallthru
      _
    // Predicated region
    $region46: #{_run_mlp_bn.1} parent=1 // pred_check
      _
    $region47: #{_run_mlp_bn.1} parent=1 // pred_check_branch
      %296 = sbr.rel (0) target = $region49
    $region48: #{_run_mlp_bn.1} parent=1 // pred_region
      %297 = dma.done [#allocation5], 128
    $region49: #{_run_mlp_bn.1} parent=1 // pred_fallthru
      _
    %298 = vsyncpa [#allocation4], 1
    %299 = vsyncpa [#allocation7], 1
    %300 = vsyncpa [#allocation5], 1

</llo_original>
